<compile_context>
chip_gen: v7x
topology: tpu7x:2x2x1
jax: 0.10.0
libtpu: 0.0.40
codegen_flags: <defaults>
</compile_context>

<pallas_src>
import functools

import jax
import jax.numpy as jnp
from jax.experimental import pallas as pl
from jax.experimental.pallas import tpu as pltpu

LANE = 128  # pad hidden / latent feature dims to one full vreg lane group

_VMEM = pl.BlockSpec(memory_space=pltpu.MemorySpace.VMEM)
_SMEM = pl.BlockSpec(memory_space=pltpu.MemorySpace.SMEM)


# ----------------------------------------------------------------------------
# In-kernel helpers
# ----------------------------------------------------------------------------
def _bce_with_logits_masked(logits, label, latent_dim):
    """Stable BCE-with-logits + accuracy, reduced over the first `latent_dim` lanes.

    logits: (B, LANE) f32, padded lanes hold 0 and are masked out.
    label:  python float 0.0 / 1.0 (constant-folded).
    """
    b, lp = logits.shape
    lane = jax.lax.broadcasted_iota(jnp.int32, (b, lp), 1)
    mask = (lane < latent_dim).astype(jnp.float32)
    inv_n = 1.0 / float(b * latent_dim)
    # max(l,0) - l*y + log(1 + exp(-|l|))   (softplus form; stable, no clipping)
    bce = (jnp.maximum(logits, 0.0) - logits * label
           + jnp.log(1.0 + jnp.exp(-jnp.abs(logits))))
    loss = jnp.sum(bce * mask) * inv_n
    pred_pos = (logits > 0.0).astype(jnp.float32)       # sigmoid(l) > 0.5  <=>  l > 0
    correct = label * pred_pos + (1.0 - label) * (1.0 - pred_pos)
    acc = jnp.sum(correct * mask) * inv_n
    return loss, acc


# ----------------------------------------------------------------------------
# Fused discriminator-step kernel (disc_real + disc_fake in one pallas_call)
#   AutoFusion -> disc(zc, label=1)  and  generator -> disc(z_g, label=0)
# ----------------------------------------------------------------------------
def _disc_step_kernel(x_ref, w_ing, b_ing, w2, b2, w3d, b3d, w4, b4, wd, bd,
                      zg_ref, met_ref, *, n_compl, latent_dim):
    x = x_ref[...].astype(jnp.float32)                    # (B, F + Ft) = [z | zt]
    b = x.shape[0]
    z = x[:, :n_compl]                                    # complementary latent (B, F)

    # [h1 | z_g] = tanh(x @ [w1 (+) wg] + [b1 | bg])  -- one 256-wide MXU pass.
    t0 = jnp.tanh(jnp.dot(x, w_ing[...], preferred_element_type=jnp.float32)
                  + b_ing[...])
    h1 = t0[:, :LANE]
    zg = t0[:, LANE:]

    # fuse_in tail: Linear -> ReLU
    zc = jnp.maximum(
        jnp.dot(h1, w2[...], preferred_element_type=jnp.float32) + b2[...], 0.0)

    # [h2_pre | real logits] = zc @ [w3 | wd]  -- shared LHS packed into one pass.
    t1 = jnp.dot(zc, w3d[...], preferred_element_type=jnp.float32) + b3d[...]
    h2 = jnp.maximum(t1[:, :LANE], 0.0)
    logits_real = t1[:, LANE:]

    # fuse_out tail + autofusion MSE
    recon = jnp.dot(h2, w4[...], preferred_element_type=jnp.float32) + b4[...]
    diff = recon - z
    auto_loss = jnp.sum(diff * diff) * (1.0 / float(b * n_compl))

    # discriminator on real (zc, label=1) and fake (z_g, label=0)
    d_loss_r, d_acc_r = _bce_with_logits_masked(logits_real, 1.0, latent_dim)
    logits_fake = jnp.dot(zg, wd[...], preferred_element_type=jnp.float32) + bd[...]
    d_loss_f, d_acc_f = _bce_with_logits_masked(logits_fake, 0.0, latent_dim)

    zg_ref[...] = zg.astype(zg_ref.dtype)                 # lane-dense (B, 128) store
    met_ref[0] = auto_loss
    met_ref[1] = d_loss_r + auto_loss                     # reference adds MSE to drl
    met_ref[2] = d_acc_r
    met_ref[3] = d_loss_f
    met_ref[4] = d_acc_f
    met_ref[5] = 0.0
    met_ref[6] = 0.0
    met_ref[7] = 0.0


# ----------------------------------------------------------------------------
# Standalone generator -> discriminator kernel (cache-miss fallback / eval path)
# ----------------------------------------------------------------------------
def _gen_disc_kernel(zt_ref, wg, bg, wd, bd, zg_ref, met_ref, *, label, latent_dim):
    zg = jnp.tanh(
        jnp.dot(zt_ref[...].astype(jnp.float32), wg[...],
                preferred_element_type=jnp.float32) + bg[...])
    logits = jnp.dot(zg, wd[...], preferred_element_type=jnp.float32) + bd[...]
    loss, acc = _bce_with_logits_masked(logits, label, latent_dim)
    zg_ref[...] = zg.astype(zg_ref.dtype)
    met_ref[0] = loss
    met_ref[1] = acc
    met_ref[2] = 0.0
    met_ref[3] = 0.0


# ----------------------------------------------------------------------------
# Score an already-computed padded z_g slab (generator matmul skipped)
# ----------------------------------------------------------------------------
def _score_zg_kernel(zg_ref, wd, bd, met_ref, *, label, latent_dim):
    logits = jnp.dot(zg_ref[...].astype(jnp.float32), wd[...],
                     preferred_element_type=jnp.float32) + bd[...]
    loss, acc = _bce_with_logits_masked(logits, label, latent_dim)
    met_ref[0] = loss
    met_ref[1] = acc
    met_ref[2] = 0.0
    met_ref[3] = 0.0


# ----------------------------------------------------------------------------
# Jitted stage wrappers (one pallas_call == one XLA dispatch per stage)
# ----------------------------------------------------------------------------
def make_disc_step_fn(latent_dim, input_features):
    kernel = functools.partial(_disc_step_kernel, n_compl=input_features,
                               latent_dim=latent_dim)

    @jax.jit
    def fn(z_compl, z_target, auto_p, disc_p, packed_p):
        batch = z_compl.shape[0]
        x_in = jnp.concatenate([z_compl, z_target], axis=1)
        zg_pad, met = pl.pallas_call(
            kernel,
            out_shape=(
                jax.ShapeDtypeStruct((batch, LANE), jnp.float32),
                jax.ShapeDtypeStruct((8,), jnp.float32),
            ),
            in_specs=[_VMEM] * 11,
            out_specs=(_VMEM, _SMEM),
        )(
            x_in,
            packed_p["w_ing"], packed_p["b_ing"],
            auto_p["w2"], auto_p["b2"],
            packed_p["w3d"], packed_p["b3d"],
            auto_p["w4"], auto_p["b4"],
            disc_p["wd"], disc_p["bd"],
        )
        return {
            "zg_pad": zg_pad,
            "z_g": zg_pad[:, :latent_dim],
            "auto_loss": met[0],
            "drl": met[1],
            "dracc": met[2],
            "dfl": met[3],
            "dfacc": met[4],
        }

    return fn


def make_gen_disc_fn(latent_dim, label):
    kernel = functools.partial(_gen_disc_kernel, label=label, latent_dim=latent_dim)

    @jax.jit
    def fn(z_target, disc_p, gen_p):
        batch = z_target.shape[0]
        zg_pad, met = pl.pallas_call(
            kernel,
            out_shape=(
                jax.ShapeDtypeStruct((batch, LANE), jnp.float32),
                jax.ShapeDtypeStruct((4,), jnp.float32),
            ),
            in_specs=[_VMEM] * 5,
            out_specs=(_VMEM, _SMEM),
        )(z_target, gen_p["wg"], gen_p["bg"], disc_p["wd"], disc_p["bd"])
        return {"loss": met[0], "accuracy": met[1], "z_g": zg_pad[:, :latent_dim]}

    return fn


def make_score_zg_fn(latent_dim, label):
    kernel = functools.partial(_score_zg_kernel, label=label, latent_dim=latent_dim)

    @jax.jit
    def fn(zg_pad, disc_p):
        met = pl.pallas_call(
            kernel,
            out_shape=jax.ShapeDtypeStruct((4,), jnp.float32),
            in_specs=[_VMEM] * 3,
            out_specs=_SMEM,
        )(zg_pad, disc_p["wd"], disc_p["bd"])
        return {"loss": met[0], "accuracy": met[1]}

    return fn


# ----------------------------------------------------------------------------
# Parameter construction (deterministic, synthetic).  Real weight values live in
# the top-left corner; the remaining rows/columns are zero so padded lanes carry
# exact zeros through tanh/relu and contribute nothing to any contraction.
# Packed weights for the fused kernel are derived here once.
# ----------------------------------------------------------------------------
def init_params(key, input_features, latent_dim, target_features, pad=LANE):
    hidden = input_features // 2
    ks = jax.random.split(key, 12)

    def lin(kw, kb, fan_in, fan_out, pad_in=None, pad_out=None):
        scale = 1.0 / jnp.sqrt(jnp.float32(fan_in))
        w = jax.random.uniform(kw, (fan_in, fan_out), jnp.float32, -scale, scale)
        b = jax.random.uniform(kb, (fan_out,), jnp.float32, -scale, scale)
        pi = pad_in if pad_in is not None else fan_in
        po = pad_out if pad_out is not None else fan_out
        wp = jnp.zeros((pi, po), jnp.float32).at[:fan_in, :fan_out].set(w)
        bp = jnp.zeros((1, po), jnp.float32).at[0, :fan_out].set(b)
        return wp, bp

    w1, b1 = lin(ks[0], ks[1], input_features, hidden, None, pad)
    w2, b2 = lin(ks[2], ks[3], hidden, latent_dim, pad, pad)
    w3, b3 = lin(ks[4], ks[5], latent_dim, hidden, pad, pad)
    w4, b4 = lin(ks[6], ks[7], hidden, input_features, pad, None)
    wd, bd = lin(ks[8], ks[9], latent_dim, latent_dim, pad, pad)
    wg, bg = lin(ks[10], ks[11], target_features, latent_dim, None, pad)

    # Packed weights for the fused disc-step kernel (single 256-wide MXU passes).
    f_c, f_t = input_features, target_features
    w_ing = jnp.zeros((f_c + f_t, 2 * pad), jnp.float32)
    w_ing = w_ing.at[:f_c, :pad].set(w1).at[f_c:, pad:].set(wg)   # block-diag [w1 (+) wg]
    b_ing = jnp.concatenate([b1, bg], axis=1)                     # (1, 256)
    w3d = jnp.concatenate([w3, wd], axis=1)                       # (128, 256), shared LHS zc
    b3d = jnp.concatenate([b3, bd], axis=1)                       # (1, 256)

    return {
        "auto": dict(w1=w1, b1=b1, w2=w2, b2=b2, w3=w3, b3=b3, w4=w4, b4=b4),
        "disc": dict(wd=wd, bd=bd),
        "gen": dict(wg=wg, bg=bg),
        "packed": dict(w_ing=w_ing, b_ing=b_ing, w3d=w3d, b3d=b3d),
    }


# ----------------------------------------------------------------------------
# Pure-JAX reference of the (unpadded) module, for correctness checks.
# ----------------------------------------------------------------------------
def _reference(params, z_compl, z_target, input_features, latent_dim):
    hidden = input_features // 2
    a, d, g = params["auto"], params["disc"], params["gen"]
    w1 = a["w1"][:, :hidden];            b1 = a["b1"][:, :hidden]
    w2 = a["w2"][:hidden, :latent_dim];  b2 = a["b2"][:, :latent_dim]
    w3 = a["w3"][:latent_dim, :hidden];  b3 = a["b3"][:, :hidden]
    w4 = a["w4"][:hidden, :];            b4 = a["b4"]
    wd = d["wd"][:latent_dim, :latent_dim]; bd = d["bd"][:, :latent_dim]
    wg = g["wg"][:, :latent_dim];        bg = g["bg"][:, :latent_dim]

    h1 = jnp.tanh(z_compl @ w1 + b1)
    zc = jax.nn.relu(h1 @ w2 + b2)
    h2 = jax.nn.relu(zc @ w3 + b3)
    recon = h2 @ w4 + b4
    auto_loss = jnp.mean((recon - z_compl) ** 2)

    def bce(logits, label):
        p = jax.nn.sigmoid(logits)
        loss = -jnp.mean(label * jnp.log(p) + (1.0 - label) * jnp.log(1.0 - p))
        pred = (p > 0.5).astype(jnp.float32)
        acc = jnp.mean(label * pred + (1.0 - label) * (1.0 - pred))
        return loss, acc

    drl, dracc = bce(zc @ wd + bd, 1.0)
    z_g = jnp.tanh(z_target @ wg + bg)
    logits_fake = z_g @ wd + bd
    dfl, dfacc = bce(logits_fake, 0.0)
    gl, gacc = bce(logits_fake, 1.0)
    return dict(dral=auto_loss, drl=drl + auto_loss, dracc=dracc,
                dfl=dfl, dfacc=dfacc, gl=gl, gacc=gacc, z_g=z_g)


# ----------------------------------------------------------------------------
# GanFusionSingle forward (control flow mirrors the PyTorch module)
# ----------------------------------------------------------------------------
class GanFusionSingle:
    def __init__(self, config, params):
        self.config = config
        self.params = params
        self.gen_metrics = None
        self.disc_metrics = None
        self._cache = None
        latent_dim = config["latent_dim"]
        input_features = config["input_features"]
        self._disc_step = make_disc_step_fn(latent_dim, input_features)
        self._gen_disc_fake = make_gen_disc_fn(latent_dim, label=0.0)
        self._gen_disc_real = make_gen_disc_fn(latent_dim, label=1.0)
        self._score_zg_real = make_score_zg_fn(latent_dim, label=1.0)

    def _cache_valid(self, z_target):
        c = self._cache
        return (c is not None and c["zt_id"] == id(z_target)
                and c["params_id"] == id(self.params))

    def forward(self, z_dict, mode, stage=None):
        if mode != "train":
            stage = "gen"
        if stage == "disc_real":
            r = self._disc_step(z_dict["compl"], z_dict["target"],
                                self.params["auto"], self.params["disc"],
                                self.params["packed"])
            # Cache the fake-side metrics and the padded z_g slab so the subsequent
            # disc_fake / gen stages need zero / one tiny dispatch respectively.
            self._cache = {
                "zt_id": id(z_dict["target"]),
                "params_id": id(self.params),
                "zg_pad": r["zg_pad"],
                "z_g": r["z_g"],
                "dfl": r["dfl"],
                "dfacc": r["dfacc"],
            }
            out = {"loss": r["drl"], "accuracy": r["dracc"], "z_g": r["z_g"]}
            self.disc_metrics = {"dral": r["auto_loss"], "drl": out["loss"],
                                 "dracc": out["accuracy"]}
            return out
        elif stage == "disc_fake":
            if self._cache_valid(z_dict["target"]):
                c = self._cache
                out = {"loss": c["dfl"], "accuracy": c["dfacc"], "z_g": c["z_g"]}
            else:
                r = self._gen_disc_fake(z_dict["target"], self.params["disc"],
                                        self.params["gen"])
                out = {"loss": r["loss"], "accuracy": r["accuracy"], "z_g": r["z_g"]}
            self.disc_metrics = {"dfl": out["loss"], "dfacc": out["accuracy"]}
            return out
        elif stage == "gen":
            if self._cache_valid(z_dict["target"]):
                c = self._cache
                r = self._score_zg_real(c["zg_pad"], self.params["disc"])
                out = {"loss": r["loss"], "accuracy": r["accuracy"], "z_g": c["z_g"]}
            else:
                r = self._gen_disc_real(z_dict["target"], self.params["disc"],
                                        self.params["gen"])
                out = {"loss": r["loss"], "accuracy": r["accuracy"], "z_g": r["z_g"]}
            self.gen_metrics = {"gl": out["loss"], "gacc": out["accuracy"]}
            return out
        else:
            raise ValueError(f"invalid stage: {stage}")


if __name__ == "__main__":
    # Small shapes consistent with the module.
    batch = 8
    input_features = 32      # compl latent size
    target_features = 32     # target latent size
    latent_dim = 16
    config = {"latent_dim": latent_dim, "input_features": input_features}

    key = jax.random.PRNGKey(0)
    k_param, k_compl, k_target = jax.random.split(key, 3)
    params = init_params(k_param, input_features, latent_dim, target_features)

    z_dict = {
        "compl": jax.random.normal(k_compl, (batch, input_features), jnp.float32),
        "target": jax.random.normal(k_target, (batch, target_features), jnp.float32),
    }

    model = GanFusionSingle(config, params)

    # Cold eval 'gen' path first (no cache): standalone generator->disc kernel.
    out_gen_cold = model.forward(z_dict, mode="eval")
    # Discriminator update step: disc_real runs the fused kernel (real + fake BCE in
    # ONE pallas_call); disc_fake is then served from cache with zero extra dispatches.
    out_real = model.forward(z_dict, mode="train", stage="disc_real")
    dral = model.disc_metrics["dral"]
    out_fake = model.forward(z_dict, mode="train", stage="disc_fake")
    # Generator step: reuses the cached padded z_g slab, only re-scores it.
    out_gen = model.forward(z_dict, mode="train", stage="gen")

    jax.block_until_ready(out_gen_cold["loss"])
    jax.block_until_ready(out_real["loss"])
    jax.block_until_ready(out_real["z_g"])
    jax.block_until_ready(out_fake["loss"])
    jax.block_until_ready(out_gen["loss"])

    # Validate against a pure-JAX reference of the unpadded module.
    ref = _reference(params, z_dict["compl"], z_dict["target"],
                     input_features, latent_dim)

    def close(a, b, tol=1e-4):
        return bool(jnp.allclose(jnp.asarray(a), jnp.asarray(b), rtol=tol, atol=tol))

    assert out_real["z_g"].shape == (batch, latent_dim)
    assert out_fake["z_g"].shape == (batch, latent_dim)
    assert out_gen_cold["z_g"].shape == (batch, latent_dim)
    assert close(out_real["z_g"], ref["z_g"], 1e-5)
    assert close(out_gen_cold["z_g"], ref["z_g"], 1e-5)
    assert close(dral, ref["dral"])
    assert close(out_real["loss"], ref["drl"])
    assert close(out_real["accuracy"], ref["dracc"])
    assert close(out_fake["loss"], ref["dfl"])
    assert close(out_fake["accuracy"], ref["dfacc"])
    assert close(out_gen["loss"], ref["gl"])
    assert close(out_gen["accuracy"], ref["gacc"])
    assert close(out_gen_cold["loss"], ref["gl"])
    assert close(out_gen_cold["accuracy"], ref["gacc"])
    assert 0.0 <= float(out_real["accuracy"]) <= 1.0
    assert 0.0 <= float(out_fake["accuracy"]) <= 1.0
    assert jnp.isfinite(jnp.asarray(out_real["loss"])).item()
    assert jnp.isfinite(jnp.asarray(out_gen["loss"])).item()

    print("KERNEL_OK")
</pallas_src>

<mosaic_0001>
module attributes {stable_mosaic.version = 11 : i64} {
  func.func @_gen_disc_kernel(%arg0: memref<8x32xf32, #tpu.memory_space<vmem>>, %arg1: memref<32x128xf32, #tpu.memory_space<vmem>>, %arg2: memref<1x128xf32, #tpu.memory_space<vmem>>, %arg3: memref<128x128xf32, #tpu.memory_space<vmem>>, %arg4: memref<1x128xf32, #tpu.memory_space<vmem>>, %arg5: memref<8x128xf32, #tpu.memory_space<vmem>>, %arg6: memref<4xf32, #tpu.memory_space<smem>>) attributes {dimension_semantics = [], scalar_prefetch = 0 : i64, scratch_operands = 0 : i64, tpu.core_type = #tpu.core_type<tc>} {
    %c0 = arith.constant 0 : index
    %c0_0 = arith.constant 0 : index
    %0 = vector.load %arg0[%c0, %c0_0] : memref<8x32xf32, #tpu.memory_space<vmem>>, vector<8x32xf32>
    %c0_1 = arith.constant 0 : index
    %c0_2 = arith.constant 0 : index
    %1 = vector.load %arg1[%c0_1, %c0_2] : memref<32x128xf32, #tpu.memory_space<vmem>>, vector<32x128xf32>
    %cst = arith.constant dense<0.000000e+00> : vector<8x128xf32>
    %2 = tpu.matmul %0, %1, %cst {dimension_numbers = #tpu.dot_dimension_numbers<[1], [0], [0], [1], [0, 0, 1, 1], [], []>} : vector<8x32xf32>, vector<32x128xf32>, vector<8x128xf32> -> vector<8x128xf32>
    %c0_3 = arith.constant 0 : index
    %c0_4 = arith.constant 0 : index
    %3 = vector.load %arg2[%c0_3, %c0_4] : memref<1x128xf32, #tpu.memory_space<vmem>>, vector<1x128xf32>
    %4 = vector.broadcast %3 : vector<1x128xf32> to vector<8x128xf32>
    %5 = arith.addf %2, %4 : vector<8x128xf32>
    %6 = math.tanh %5 : vector<8x128xf32>
    %c0_5 = arith.constant 0 : index
    %c0_6 = arith.constant 0 : index
    %7 = vector.load %arg3[%c0_5, %c0_6] : memref<128x128xf32, #tpu.memory_space<vmem>>, vector<128x128xf32>
    %cst_7 = arith.constant dense<0.000000e+00> : vector<8x128xf32>
    %8 = tpu.matmul %6, %7, %cst_7 {dimension_numbers = #tpu.dot_dimension_numbers<[1], [0], [0], [1], [0, 0, 1, 1], [], []>} : vector<8x128xf32>, vector<128x128xf32>, vector<8x128xf32> -> vector<8x128xf32>
    %c0_8 = arith.constant 0 : index
    %c0_9 = arith.constant 0 : index
    %9 = vector.load %arg4[%c0_8, %c0_9] : memref<1x128xf32, #tpu.memory_space<vmem>>, vector<1x128xf32>
    %10 = vector.broadcast %9 : vector<1x128xf32> to vector<8x128xf32>
    %11 = arith.addf %8, %10 : vector<8x128xf32>
    %12 = tpu.iota {dimensions = array<i32: 1>} : vector<8x128xi32>
    %c16_i32 = arith.constant 16 : i32
    %13 = vector.broadcast %c16_i32 : i32 to vector<8x128xi32>
    %14 = arith.cmpi slt, %12, %13 : vector<8x128xi32>
    %15 = arith.extui %14 : vector<8x128xi1> to vector<8x128xi32>
    %16 = arith.sitofp %15 : vector<8x128xi32> to vector<8x128xf32>
    %cst_10 = arith.constant 0.000000e+00 : f32
    %17 = vector.broadcast %cst_10 : f32 to vector<8x128xf32>
    %18 = arith.maximumf %11, %17 : vector<8x128xf32>
    %cst_11 = arith.constant 1.000000e+00 : f32
    %19 = vector.broadcast %cst_11 : f32 to vector<8x128xf32>
    %20 = arith.mulf %11, %19 : vector<8x128xf32>
    %21 = arith.subf %18, %20 : vector<8x128xf32>
    %22 = math.absf %11 : vector<8x128xf32>
    %cst_12 = arith.constant 0.000000e+00 : f32
    %23 = vector.broadcast %cst_12 : f32 to vector<8x128xf32>
    %24 = arith.subf %23, %22 : vector<8x128xf32>
    %25 = math.exp %24 : vector<8x128xf32>
    %cst_13 = arith.constant 1.000000e+00 : f32
    %26 = vector.broadcast %cst_13 : f32 to vector<8x128xf32>
    %27 = arith.addf %26, %25 : vector<8x128xf32>
    %28 = math.log %27 : vector<8x128xf32>
    %29 = arith.addf %21, %28 : vector<8x128xf32>
    %30 = arith.mulf %29, %16 : vector<8x128xf32>
    %31 = vector.shape_cast %30 : vector<8x128xf32> to vector<1x8x128xf32>
    %cst_14 = arith.constant dense<0.000000e+00> : vector<1xf32>
    %32 = vector.multi_reduction <add>, %31, %cst_14 [1, 2] : vector<1x8x128xf32> to vector<1xf32>
    %33 = vector.shape_cast %32 : vector<1xf32> to vector<1x1x1xf32>
    %34 = vector.extract %33[0, 0, 0] : f32 from vector<1x1x1xf32>
    %cst_15 = arith.constant 7.812500e-03 : f32
    %35 = arith.mulf %34, %cst_15 : f32
    %cst_16 = arith.constant 0.000000e+00 : f32
    %36 = vector.broadcast %cst_16 : f32 to vector<8x128xf32>
    %37 = arith.cmpf ogt, %11, %36 : vector<8x128xf32>
    %38 = arith.extui %37 : vector<8x128xi1> to vector<8x128xi32>
    %39 = arith.sitofp %38 : vector<8x128xi32> to vector<8x128xf32>
    %cst_17 = arith.constant 1.000000e+00 : f32
    %40 = vector.broadcast %cst_17 : f32 to vector<8x128xf32>
    %41 = arith.mulf %40, %39 : vector<8x128xf32>
    %cst_18 = arith.constant 1.000000e+00 : f32
    %42 = vector.broadcast %cst_18 : f32 to vector<8x128xf32>
    %43 = arith.subf %42, %39 : vector<8x128xf32>
    %cst_19 = arith.constant 0.000000e+00 : f32
    %44 = vector.broadcast %cst_19 : f32 to vector<8x128xf32>
    %45 = arith.mulf %44, %43 : vector<8x128xf32>
    %46 = arith.addf %41, %45 : vector<8x128xf32>
    %47 = arith.mulf %46, %16 : vector<8x128xf32>
    %48 = vector.shape_cast %47 : vector<8x128xf32> to vector<1x8x128xf32>
    %cst_20 = arith.constant dense<0.000000e+00> : vector<1xf32>
    %49 = vector.multi_reduction <add>, %48, %cst_20 [1, 2] : vector<1x8x128xf32> to vector<1xf32>
    %50 = vector.shape_cast %49 : vector<1xf32> to vector<1x1x1xf32>
    %51 = vector.extract %50[0, 0, 0] : f32 from vector<1x1x1xf32>
    %cst_21 = arith.constant 7.812500e-03 : f32
    %52 = arith.mulf %51, %cst_21 : f32
    %c0_22 = arith.constant 0 : index
    %c0_23 = arith.constant 0 : index
    %53 = vector.load %arg5[%c0_22, %c0_23] : memref<8x128xf32, #tpu.memory_space<vmem>>, vector<8x128xf32>
    tpu.vector_store %arg5[%c0_22, %c0_23], %6 {strides = array<i32>} : memref<8x128xf32, #tpu.memory_space<vmem>>, vector<8x128xf32>,
    %c0_24 = arith.constant 0 : index
    %54 = memref.load %arg6[%c0_24] : memref<4xf32, #tpu.memory_space<smem>>
    memref.store %35, %arg6[%c0_24] : memref<4xf32, #tpu.memory_space<smem>>
    %c1 = arith.constant 1 : index
    %55 = memref.load %arg6[%c1] : memref<4xf32, #tpu.memory_space<smem>>
    memref.store %52, %arg6[%c1] : memref<4xf32, #tpu.memory_space<smem>>
    %cst_25 = arith.constant 0.000000e+00 : f32
    %c2 = arith.constant 2 : index
    %56 = memref.load %arg6[%c2] : memref<4xf32, #tpu.memory_space<smem>>
    memref.store %cst_25, %arg6[%c2] : memref<4xf32, #tpu.memory_space<smem>>
    %cst_26 = arith.constant 0.000000e+00 : f32
    %c3 = arith.constant 3 : index
    %57 = memref.load %arg6[%c3] : memref<4xf32, #tpu.memory_space<smem>>
    memref.store %cst_26, %arg6[%c3] : memref<4xf32, #tpu.memory_space<smem>>
    return
  }
}

</mosaic_0001>

<llo_original>
// kernel: fn.1
$region0: #{fn.1}
  #allocation0 [shape = 'u32[]', space=smem, size = 0x4, offset = 0x4, fixed_abs, tag = 'smem constant byte address 0x4 - core index']
  #allocation1 [shape = 'u32[144,128]{1,0:T(1,128)}', space=vmem, size = 0x12000, scoped, tag = 'internal scratch']
  %s0 = inlined_call_operand.hbm [shape: f32[8,32], index: 0, kind: input, shape index: {}]
  %s1 = inlined_call_operand.hbm [shape: f32[32,128], index: 1, kind: input, shape index: {}]
  %s2 = inlined_call_operand.vmem [shape: f32[1,128], index: 2, kind: input, shape index: {}]
  %s3 = inlined_call_operand.hbm [shape: f32[128,128], index: 3, kind: input, shape index: {}]
  %s4 = inlined_call_operand.vmem [shape: f32[1,128], index: 4, kind: input, shape index: {}]
  %s5 = inlined_call_operand.hbm [shape: f32[8,128], index: 5, kind: output, shape index: {0}]
  %s6 = inlined_call_operand.vmem [shape: f32[4], index: 6, kind: output, shape index: {1}]
  %7 = xla_tuple %s5, %s6
  %s8 = sld [smem:[#allocation0]]
  $region50: #{fn.1} parent=0
    _
  %s10 = ssub.s32 1, %s8
  %s11 = scalar_select 0, %s10, %s8
  $region1: #{fn.1} parent=0
    #allocation2 [shape = 'u8[4096]{0}', space=vmem, size = 0x1000, scoped, tag = 'input window, operand 0, single buffered']
    #allocation3 [shape = 's32[1]{0}', space=sflag, size = 0x4, scoped, tag = 'scoped memory for fn.1']
    #allocation4 [shape = 's32[1]{0}', space=sflag, size = 0x4, scoped, tag = 'scoped memory for fn.1']
    #allocation5 [shape = 's32[1]{0}', space=sflag, size = 0x4, scoped, tag = 'scoped memory for fn.1']
    #allocation6 [shape = 'u8[16384]{0}', space=vmem, size = 0x4000, scoped, tag = 'input window, operand 1, single buffered']
    #allocation7 [shape = 's32[1]{0}', space=sflag, size = 0x4, scoped, tag = 'scoped memory for fn.1']
    #allocation8 [shape = 'u8[65536]{0}', space=vmem, size = 0x10000, scoped, tag = 'input window, operand 3, single buffered']
    #allocation9 [shape = 'u8[4096]{0}', space=vmem, size = 0x1000, scoped, tag = 'output window, operand 0, single buffered']
    #allocation10 [shape = 'u8[512]{0}', space=smem, size = 0x200, scoped, tag = 'output window, operand 1, single buffered']
    %12 = vsyncpa [#allocation3], 0
    %13 = vsyncpa [#allocation7], 0
    %14 = vsyncpa [#allocation4], 0
    %15 = vsyncpa [#allocation5], 0
    // Predicated region
    $region2: #{fn.1} parent=1 // pred_check
      _
    $region3: #{fn.1} parent=1 // pred_check_branch
      %17 = sbr.rel (0) target = $region5
    $region4: #{fn.1} parent=1 // pred_region
      %s19 = ssub.s32 128, 128
      %20 = vsyncadd [#allocation3], %s19
      %s22 = sshll.u32 [#allocation2], 4
      %s23 = int_to_ptr.vmem [resolvable:$true] %s22
      %25 = dma.hbm_to_vmem [thread:$0]  %s0, 128, %s23, [#allocation3]
    $region5: #{fn.1} parent=1 // pred_fallthru
      _
    // Predicated region
    $region6: #{fn.1} parent=1 // pred_check
      _
    $region7: #{fn.1} parent=1 // pred_check_branch
      %27 = sbr.rel (0) target = $region9
    $region8: #{fn.1} parent=1 // pred_region
      %s29 = ssub.s32 512, 512
      %30 = vsyncadd [#allocation7], %s29
      %s31 = sshll.u32 [#allocation6], 4
      %s32 = int_to_ptr.vmem [resolvable:$true] %s31
      %37 = dma.hbm_to_vmem [thread:$0]  %s1, 512, %s32, [#allocation7], 128, 128, 8
    $region9: #{fn.1} parent=1 // pred_fallthru
      _
    // Predicated region
    $region10: #{fn.1} parent=1 // pred_check
      _
    $region11: #{fn.1} parent=1 // pred_check_branch
      %39 = sbr.rel (0) target = $region13
    $region12: #{fn.1} parent=1 // pred_region
      _
    $region13: #{fn.1} parent=1 // pred_fallthru
      _
    // Predicated region
    $region14: #{fn.1} parent=1 // pred_check
      _
    $region15: #{fn.1} parent=1 // pred_check_branch
      %41 = sbr.rel (0) target = $region17
    $region16: #{fn.1} parent=1 // pred_region
      %s43 = ssub.s32 2048, 2048
      %44 = vsyncadd [#allocation7], %s43
      %s45 = sshll.u32 [#allocation8], 4
      %s46 = int_to_ptr.vmem [resolvable:$true] %s45
      %51 = dma.hbm_to_vmem [thread:$0]  %s3, 2048, %s46, [#allocation7], 128, 128, 8
    $region17: #{fn.1} parent=1 // pred_fallthru
      _
    // Predicated region
    $region18: #{fn.1} parent=1 // pred_check
      _
    $region19: #{fn.1} parent=1 // pred_check_branch
      %53 = sbr.rel (0) target = $region21
    $region20: #{fn.1} parent=1 // pred_region
      _
    $region21: #{fn.1} parent=1 // pred_fallthru
      _
    // Predicated region
    $region22: #{fn.1} parent=1 // pred_check
      _
    $region23: #{fn.1} parent=1 // pred_check_branch
      %55 = sbr.rel (0) target = $region25
    $region24: #{fn.1} parent=1 // pred_region
      %56 = dma.done [#allocation3], 128
    $region25: #{fn.1} parent=1 // pred_fallthru
      _
    // Predicated region
    $region26: #{fn.1} parent=1 // pred_check
      _
    $region27: #{fn.1} parent=1 // pred_check_branch
      %58 = sbr.rel (0) target = $region29
    $region28: #{fn.1} parent=1 // pred_region
      %59 = dma.done [#allocation7], 512
    $region29: #{fn.1} parent=1 // pred_fallthru
      _
    // Predicated region
    $region30: #{fn.1} parent=1 // pred_check
      _
    $region31: #{fn.1} parent=1 // pred_check_branch
      %61 = sbr.rel (0) target = $region33
    $region32: #{fn.1} parent=1 // pred_region
      %62 = dma.done [#allocation7], 2048
    $region33: #{fn.1} parent=1 // pred_fallthru
      _
    %v63 = vld [vmem:[#allocation2] sm:$0xff]
    %v64 = vld [vmem:[#allocation6] sm:$0xff]
    %v65 = vld [vmem:[#allocation6 + $0x8] sm:$0xff]
    %v66 = vld [vmem:[#allocation6 + $0x10] sm:$0xff]
    %v67 = vld [vmem:[#allocation6 + $0x18] sm:$0xff]
    %v68 = vld [vmem:[%s2] sm:$0x1]
    %v70 = vlaneseq
    %v71 = vshrl.u32 %v70, 7
    %v72 = vsub.s32 0, %v71
    %v73 = vrot.slane %v68, %v72
    %vm75 = vcmask 261120
    %v77 = vsel %vm75, %v63, 0
    %79 = vmatprep.subr.mxu0 0.0
    %80 = vmatpush1.msra.mxu0 %v64
    %81 = vmatprep.subr.mxu0 0.0
    %82 = vmatpush1.msra.mxu0 %v65
    %83 = vmatprep.subr.mxu0 0.0
    %84 = vmatpush1.msra.mxu0 %v66
    %85 = vmatprep.subr.mxu0 0.0
    %86 = vmatpush1.msra.mxu0 %v67
    %87 = vmatprep.subr.mxu0 0.0
    %88 = vmatpush1.msra.mxu0 0.0
    %89 = vmatprep.subr.mxu0 0.0
    %90 = vmatpush1.msra.mxu0 0.0
    %91 = vmatprep.subr.mxu0 0.0
    %92 = vmatpush1.msra.mxu0 0.0
    %93 = vmatprep.subr.mxu0 0.0
    %94 = vmatpush1.msra.mxu0 0.0
    %95 = vmatprep.subr.mxu0 0.0
    %96 = vmatpush1.msra.mxu0 0.0
    %97 = vmatprep.subr.mxu0 0.0
    %98 = vmatpush1.msra.mxu0 0.0
    %99 = vmatprep.subr.mxu0 0.0
    %100 = vmatpush1.msra.mxu0 0.0
    %101 = vmatprep.subr.mxu0 0.0
    %102 = vmatpush1.msra.mxu0 0.0
    %103 = vmatprep.subr.mxu0 0.0
    %104 = vmatpush1.msra.mxu0 0.0
    %105 = vmatprep.subr.mxu0 0.0
    %106 = vmatpush1.msra.mxu0 0.0
    %107 = vmatprep.subr.mxu0 0.0
    %108 = vmatpush1.msra.mxu0 0.0
    %109 = vmatprep.subr.mxu0 0.0
    %110 = vmatpush1.msra.mxu0 0.0
    %111 = vmatprep.subr.mxu0 0.0
    %112 = vmatpush1.msra.mxu0 0.0
    %113 = vmatprep.subr.mxu0 0.0
    %114 = vmatpush1.msra.mxu0 0.0
    %115 = vmatprep.subr.mxu0 0.0
    %116 = vmatpush1.msra.mxu0 0.0
    %117 = vmatprep.subr.mxu0 0.0
    %118 = vmatpush1.msra.mxu0 0.0
    %119 = vmatprep.subr.mxu0 0.0
    %120 = vmatpush1.msra.mxu0 0.0
    %121 = vmatprep.subr.mxu0 0.0
    %122 = vmatpush1.msra.mxu0 0.0
    %123 = vmatprep.subr.mxu0 0.0
    %124 = vmatpush1.msra.mxu0 0.0
    %125 = vmatprep.subr.mxu0 0.0
    %126 = vmatpush1.msra.mxu0 0.0
    %127 = vmatprep.subr.mxu0 0.0
    %128 = vmatpush1.msra.mxu0 0.0
    %129 = vmatprep.subr.mxu0 0.0
    %130 = vmatpush1.msra.mxu0 0.0
    %131 = vmatprep.subr.mxu0 0.0
    %132 = vmatpush1.msra.mxu0 0.0
    %133 = vmatprep.subr.mxu0 0.0
    %134 = vmatpush1.msra.mxu0 0.0
    %135 = vmatprep.subr.mxu0 0.0
    %136 = vmatpush1.msra.mxu0 0.0
    %137 = vmatprep.subr.mxu0 0.0
    %138 = vmatpush1.msra.mxu0 0.0
    %139 = vmatprep.subr.mxu0 0.0
    %140 = vmatpush1.msra.mxu0 0.0
    %141 = vmatprep.subr.mxu0 0.0
    %142 = vmatpush1.msra.mxu0 0.0
    %143 = vmatprep.mubr.f32.mxu0 0.0
    %144 = vmatmul.mubr.f32.gmra.mrb[0].mxu0 %v77
    %v145 = vpop.f32.mrb[0].mxu0
    %v146 = vadd.f32 %v73, %v145
    %v147 = vpop.f32.mrb[0].mxu0
    %148 = vdwg.mxu0
    %v149 = vtanh.pop %v146
    %v150 = vld [vmem:[#allocation8] sm:$0xff]
    %v151 = vld [vmem:[#allocation8 + $0x8] sm:$0xff]
    %v152 = vld [vmem:[#allocation8 + $0x10] sm:$0xff]
    %v153 = vld [vmem:[#allocation8 + $0x18] sm:$0xff]
    %v154 = vld [vmem:[#allocation8 + $0x20] sm:$0xff]
    %v155 = vld [vmem:[#allocation8 + $0x28] sm:$0xff]
    %v156 = vld [vmem:[#allocation8 + $0x30] sm:$0xff]
    %v157 = vld [vmem:[#allocation8 + $0x38] sm:$0xff]
    %v158 = vld [vmem:[#allocation8 + $0x40] sm:$0xff]
    %v159 = vld [vmem:[#allocation8 + $0x48] sm:$0xff]
    %v160 = vld [vmem:[#allocation8 + $0x50] sm:$0xff]
    %v161 = vld [vmem:[#allocation8 + $0x58] sm:$0xff]
    %v162 = vld [vmem:[#allocation8 + $0x60] sm:$0xff]
    %v163 = vld [vmem:[#allocation8 + $0x68] sm:$0xff]
    %v164 = vld [vmem:[#allocation8 + $0x70] sm:$0xff]
    %v165 = vld [vmem:[#allocation8 + $0x78] sm:$0xff]
    %v166 = vld [vmem:[%s4] sm:$0x1]
    %v168 = vlaneseq
    %v169 = vshrl.u32 %v168, 7
    %v170 = vsub.s32 0, %v169
    %v171 = vrot.slane %v166, %v170
    %173 = vmatprep.subr.mxu0 0.0
    %174 = vmatpush1.msra.mxu0 %v150
    %175 = vmatprep.subr.mxu0 0.0
    %176 = vmatpush1.msra.mxu0 %v151
    %177 = vmatprep.subr.mxu0 0.0
    %178 = vmatpush1.msra.mxu0 %v152
    %179 = vmatprep.subr.mxu0 0.0
    %180 = vmatpush1.msra.mxu0 %v153
    %181 = vmatprep.subr.mxu0 0.0
    %182 = vmatpush1.msra.mxu0 %v154
    %183 = vmatprep.subr.mxu0 0.0
    %184 = vmatpush1.msra.mxu0 %v155
    %185 = vmatprep.subr.mxu0 0.0
    %186 = vmatpush1.msra.mxu0 %v156
    %187 = vmatprep.subr.mxu0 0.0
    %188 = vmatpush1.msra.mxu0 %v157
    %189 = vmatprep.subr.mxu0 0.0
    %190 = vmatpush1.msra.mxu0 %v158
    %191 = vmatprep.subr.mxu0 0.0
    %192 = vmatpush1.msra.mxu0 %v159
    %193 = vmatprep.subr.mxu0 0.0
    %194 = vmatpush1.msra.mxu0 %v160
    %195 = vmatprep.subr.mxu0 0.0
    %196 = vmatpush1.msra.mxu0 %v161
    %197 = vmatprep.subr.mxu0 0.0
    %198 = vmatpush1.msra.mxu0 %v162
    %199 = vmatprep.subr.mxu0 0.0
    %200 = vmatpush1.msra.mxu0 %v163
    %201 = vmatprep.subr.mxu0 0.0
    %202 = vmatpush1.msra.mxu0 %v164
    %203 = vmatprep.subr.mxu0 0.0
    %204 = vmatpush1.msra.mxu0 %v165
    %205 = vmatprep.subr.mxu0 0.0
    %206 = vmatpush1.msra.mxu0 0.0
    %207 = vmatprep.subr.mxu0 0.0
    %208 = vmatpush1.msra.mxu0 0.0
    %209 = vmatprep.subr.mxu0 0.0
    %210 = vmatpush1.msra.mxu0 0.0
    %211 = vmatprep.subr.mxu0 0.0
    %212 = vmatpush1.msra.mxu0 0.0
    %213 = vmatprep.subr.mxu0 0.0
    %214 = vmatpush1.msra.mxu0 0.0
    %215 = vmatprep.subr.mxu0 0.0
    %216 = vmatpush1.msra.mxu0 0.0
    %217 = vmatprep.subr.mxu0 0.0
    %218 = vmatpush1.msra.mxu0 0.0
    %219 = vmatprep.subr.mxu0 0.0
    %220 = vmatpush1.msra.mxu0 0.0
    %221 = vmatprep.subr.mxu0 0.0
    %222 = vmatpush1.msra.mxu0 0.0
    %223 = vmatprep.subr.mxu0 0.0
    %224 = vmatpush1.msra.mxu0 0.0
    %225 = vmatprep.subr.mxu0 0.0
    %226 = vmatpush1.msra.mxu0 0.0
    %227 = vmatprep.subr.mxu0 0.0
    %228 = vmatpush1.msra.mxu0 0.0
    %229 = vmatprep.subr.mxu0 0.0
    %230 = vmatpush1.msra.mxu0 0.0
    %231 = vmatprep.subr.mxu0 0.0
    %232 = vmatpush1.msra.mxu0 0.0
    %233 = vmatprep.subr.mxu0 0.0
    %234 = vmatpush1.msra.mxu0 0.0
    %235 = vmatprep.subr.mxu0 0.0
    %236 = vmatpush1.msra.mxu0 0.0
    %237 = vmatprep.mubr.f32.mxu0 0.0
    %238 = vmatmul.mubr.f32.gmra.mrb[0].mxu0 %v149
    %v239 = vpop.f32.mrb[0].mxu0
    %v240 = vadd.f32 %v171, %v239
    %v241 = vpop.f32.mrb[0].mxu0
    %242 = vdwg.mxu0
    %v243 = vlaneseq
    %v244 = vand.u32 %v243, 127
    %vm245 = vcmp.lt.s32.totalorder %v244, 16
    %v246 = vsel %vm245, 1, 0
    %v247 = vcvt.s32.f32 %v246
    %v248 = vmax.f32 %v240, 0.0
    %v249 = vsub.f32 %v248, %v240
    %v250 = vand.u32 2147483647, %v240
    %v251 = vsub.f32 0.0, %v250
    %v252 = vmul.f32 %v251, 1.442695
    %v253 = vpow.pop %v252
    %v254 = vadd.f32 %v253, 1.0
    %v255 = vlog2.pop %v254
    %v256 = vmul.f32 %v255, 0.6931472
    %v257 = vadd.f32 %v249, %v256
    %v258 = vmul.f32 %v257, %v247
    %259 = vadd.xlane.f32.xlu0 %v258
    %v260 = vpop.xlane.xlu0 %259
    %v261 = vrot.slane %v260, 4
    %v262 = vadd.f32 %v260, %v261
    %v263 = vrot.slane %v262, 2
    %v264 = vadd.f32 %v262, %v263
    %v265 = vrot.slane %v264, 1
    %v266 = vadd.f32 %v264, %v265
    %s267 = vtos %v266
    %s268 = smul.f32 %s267, 0.0078125
    %vm269 = vcmp.gt.f32.partialorder %v240, 0.0
    %v270 = vsel %vm269, 1, 0
    %v271 = vcvt.s32.f32 %v270
    %v272 = vsub.f32 1.0, %v271
    %v273 = vmul.f32 %v272, 0.0
    %v274 = vadd.f32 %v271, %v273
    %v275 = vmul.f32 %v274, %v247
    %276 = vadd.xlane.f32.xlu0 %v275
    %v277 = vpop.xlane.xlu0 %276
    %v278 = vrot.slane %v277, 4
    %v279 = vadd.f32 %v277, %v278
    %v280 = vrot.slane %v279, 2
    %v281 = vadd.f32 %v279, %v280
    %v282 = vrot.slane %v281, 1
    %v283 = vadd.f32 %v281, %v282
    %s284 = vtos %v283
    %s285 = smul.f32 %s284, 0.0078125
    %286 = vst [vmem:[#allocation9] sm:$0xff] %v149
    %s287 = scalar_lea.smem [#allocation10], 0
    %288 = sst [smem:[%s287]] %s268
    %s289 = scalar_lea.smem [#allocation10], 1
    %290 = sst [smem:[%s289]] %s285
    %s291 = scalar_lea.smem [#allocation10], 2
    %292 = sst [smem:[%s291]] 0.0
    %s293 = scalar_lea.smem [#allocation10], 3
    %294 = sst [smem:[%s293]] 0.0
    // Predicated region
    $region34: #{fn.1} parent=1 // pred_check
      _
    $region35: #{fn.1} parent=1 // pred_check_branch
      %296 = sbr.rel (0) target = $region37
    $region36: #{fn.1} parent=1 // pred_region
      %s298 = ssub.s32 128, 128
      %299 = vsyncadd [#allocation4], %s298
      %s301 = sshll.u32 [#allocation9], 4
      %s302 = int_to_ptr.vmem [resolvable:$true] %s301
      %304 = dma.vmem_to_hbm [thread:$0]  %s302, 128, %s5, [#allocation4]
    $region37: #{fn.1} parent=1 // pred_fallthru
      _
    // Predicated region
    $region38: #{fn.1} parent=1 // pred_check
      _
    $region39: #{fn.1} parent=1 // pred_check_branch
      %306 = sbr.rel (0) target = $region41
    $region40: #{fn.1} parent=1 // pred_region
      %s308 = ssub.s32 16, 16
      %309 = vsyncadd [#allocation5], %s308
      %s311 = sshll.u32 %s6, 4
      %s312 = int_to_ptr.vmem [resolvable:$true] %s311
      %314 = dma.smem_to_vmem [#allocation10], 16, %s312, [#allocation5]
    $region41: #{fn.1} parent=1 // pred_fallthru
      _
    // Predicated region
    $region42: #{fn.1} parent=1 // pred_check
      _
    $region43: #{fn.1} parent=1 // pred_check_branch
      %316 = sbr.rel (0) target = $region45
    $region44: #{fn.1} parent=1 // pred_region
      %317 = dma.done [#allocation4], 128
    $region45: #{fn.1} parent=1 // pred_fallthru
      _
    // Predicated region
    $region46: #{fn.1} parent=1 // pred_check
      _
    $region47: #{fn.1} parent=1 // pred_check_branch
      %319 = sbr.rel (0) target = $region49
    $region48: #{fn.1} parent=1 // pred_region
      %320 = dma.done [#allocation5], 16
    $region49: #{fn.1} parent=1 // pred_fallthru
      _
    %321 = sfence
    %322 = vsyncpa [#allocation3], 1
    %323 = vsyncpa [#allocation7], 1
    %324 = vsyncpa [#allocation4], 1
    %325 = vsyncpa [#allocation5], 1

</llo_original>
